<compile_context>
chip_gen: v5e
topology: v5e:2x2
jax: 0.10.0
libtpu: 0.0.40
codegen_flags: <defaults>
</compile_context>

<pallas_src>
import math

import jax
import jax.numpy as jnp
from jax.experimental import pallas as pl
from jax.experimental.pallas import tpu as pltpu

HIDDEN = 64
LANE = 128
SUBLANE = 8
TARGET_BLOCK_BYTES = 2 * 1024 * 1024   # ~2 MiB of f32 activations per input block
MAX_TB = 32 * 1024                     # keeps the (tb, 64) f32 hidden tile <= 8 MiB


def _cdiv(a, b):
    return -(-a // b)


def _round_up(x, m):
    return _cdiv(x, m) * m


def _choose_tb(batch, d):
    """Batch rows per grid step (static, derived from shapes)."""
    tb = TARGET_BLOCK_BYTES // (d * 4)
    tb = max(LANE, (tb // LANE) * LANE)
    tb = min(tb, MAX_TB)
    if batch > LANE:
        # Ensure >= 2 grid steps so "parallel" engages both TensorCores on v7x.
        tb = min(tb, _round_up(_cdiv(batch, 2), LANE))
    if tb >= batch:
        return batch            # single full-extent block (always legal)
    return tb


def affinity_kernel(a_ref, m_ref, w1a_ref, w1m_ref, b1_ref, w2_ref, b2_ref,
                    out_ref):
    # a_ref, m_ref : (tb, D)  f32  native-layout activation tiles
    # w1a_ref      : (D, 64)  bf16 fc1.weight[:, :D].T
    # w1m_ref      : (D, 64)  bf16 fc1.weight[:, D:].T
    # b1_ref       : (1, 64)  f32
    # w2_ref       : (1, 64)  f32  fc2.weight as a row
    # b2_ref       : (1,)     f32  SMEM scalar
    # out_ref      : (tb, 1)  f32
    a = a_ref[...].astype(jnp.bfloat16)
    m = m_ref[...].astype(jnp.bfloat16)
    # In-kernel "concat": two bf16 MXU matmuls accumulated in f32 equal the
    # pre-activation of fc1(cat([a, m], dim=1)).
    h = jnp.dot(a, w1a_ref[...], preferred_element_type=jnp.float32)
    h = h + jnp.dot(m, w1m_ref[...], preferred_element_type=jnp.float32)
    h = jnp.maximum(h + b1_ref[...], 0.0)                     # bias + ReLU (VPU)
    # fc2 as a VPU multiply + cross-lane (XLU) reduce -- no N=1 MXU matmul.
    y = jnp.sum(h * w2_ref[...], axis=1, keepdims=True)       # (tb, 1) f32
    out_ref[...] = jax.nn.sigmoid(y + b2_ref[0])


@jax.jit
def affinity_network(antisense_feat, mrna_feat, prepared):
    """antisense_feat, mrna_feat: (B, D) float32.  Returns (B, 1) float32."""
    B, D = antisense_feat.shape
    tb = _choose_tb(B, D)
    grid = (_cdiv(B, tb),)

    flops = 2 * B * (2 * D) * HIDDEN + 4 * B * HIDDEN
    bytes_accessed = (2 * B * D * 4 + B * 4
                      + 2 * D * HIDDEN * 2 + (2 * HIDDEN + 1) * 4)

    return pl.pallas_call(
        affinity_kernel,
        out_shape=jax.ShapeDtypeStruct((B, 1), jnp.float32),
        grid=grid,
        in_specs=[
            pl.BlockSpec((tb, D), lambda i: (i, 0)),             # antisense tile
            pl.BlockSpec((tb, D), lambda i: (i, 0)),             # mrna tile
            pl.BlockSpec((D, HIDDEN), lambda i: (0, 0)),         # W1a^T (resident)
            pl.BlockSpec((D, HIDDEN), lambda i: (0, 0)),         # W1m^T (resident)
            pl.BlockSpec((1, HIDDEN), lambda i: (0, 0)),         # b1 (resident)
            pl.BlockSpec((1, HIDDEN), lambda i: (0, 0)),         # w2 row (resident)
            pl.BlockSpec(memory_space=pltpu.MemorySpace.SMEM),   # b2 scalar
        ],
        out_specs=pl.BlockSpec((tb, 1), lambda i: (i, 0)),
        compiler_params=pltpu.CompilerParams(
            dimension_semantics=("parallel",),
            vmem_limit_bytes=48 * 1024 * 1024,
        ),
        cost_estimate=pl.CostEstimate(
            flops=flops, transcendentals=B, bytes_accessed=bytes_accessed),
    )(antisense_feat, mrna_feat,
      prepared["w1a_t"], prepared["w1m_t"],
      prepared["b1_row"], prepared["w2_row"], prepared["b2"])


def prepare_params(params):
    """One-time (hoisted out of the forward) parameter conversion."""
    w1, b1, w2, b2 = params["w1"], params["b1"], params["w2"], params["b2"]
    d = w1.shape[1] // 2
    return {
        "w1a_t": jnp.asarray(w1[:, :d].T, dtype=jnp.bfloat16),   # (D, 64)
        "w1m_t": jnp.asarray(w1[:, d:].T, dtype=jnp.bfloat16),   # (D, 64)
        "b1_row": b1.reshape(1, HIDDEN).astype(jnp.float32),     # (1, 64)
        "w2_row": w2.reshape(1, HIDDEN).astype(jnp.float32),     # (1, 64)
        "b2": b2.reshape(1).astype(jnp.float32),                 # (1,)
    }


def init_params(key, input_dim):
    """nn.Linear-style init, weights kept in PyTorch (out_features, in_features) layout."""
    k1, k2, k3, k4 = jax.random.split(key, 4)
    fan1 = input_dim * 2
    bound1 = 1.0 / math.sqrt(fan1)
    bound2 = 1.0 / math.sqrt(HIDDEN)
    return {
        "w1": jax.random.uniform(k1, (HIDDEN, fan1), jnp.float32, -bound1, bound1),
        "b1": jax.random.uniform(k2, (HIDDEN,), jnp.float32, -bound1, bound1),
        "w2": jax.random.uniform(k3, (1, HIDDEN), jnp.float32, -bound2, bound2),
        "b2": jax.random.uniform(k4, (1,), jnp.float32, -bound2, bound2),
    }


def reference(antisense_feat, mrna_feat, params):
    combined = jnp.concatenate([antisense_feat, mrna_feat], axis=1)
    x = jax.nn.relu(combined @ params["w1"].T + params["b1"])
    return jax.nn.sigmoid(x @ params["w2"].T + params["b2"])


if __name__ == "__main__":
    key = jax.random.PRNGKey(0)
    k_params, k_a, k_m = jax.random.split(key, 3)

    B, D = 8, 32                      # batch=8, input_dim=32
    params = init_params(k_params, D)
    prepared = prepare_params(params)  # one-time, outside the jitted forward

    antisense = jax.random.normal(k_a, (B, D), jnp.float32)
    mrna = jax.random.normal(k_m, (B, D), jnp.float32)

    out = affinity_network(antisense, mrna, prepared)
    out = jax.block_until_ready(out)

    ref = reference(antisense, mrna, params)
    assert out.shape == (B, 1), out.shape
    assert bool(jnp.all(jnp.isfinite(out)))
    # bf16 activations/W1 on the MXU -> slightly looser tolerance vs f32 ref.
    assert jnp.allclose(out, ref, atol=1e-2, rtol=1e-2), (out, ref)

    print("KERNEL_OK")
</pallas_src>

<mosaic_0001>
module attributes {stable_mosaic.version = 11 : i64} {
  func.func @affinity_kernel(%arg0: i32, %arg1: memref<8x32xf32, #tpu.memory_space<vmem>>, %arg2: memref<8x32xf32, #tpu.memory_space<vmem>>, %arg3: memref<32x64xbf16, #tpu.memory_space<vmem>>, %arg4: memref<32x64xbf16, #tpu.memory_space<vmem>>, %arg5: memref<1x64xf32, #tpu.memory_space<vmem>>, %arg6: memref<1x64xf32, #tpu.memory_space<vmem>>, %arg7: memref<1xf32, #tpu.memory_space<smem>>, %arg8: memref<8x1xf32, #tpu.memory_space<vmem>>) attributes {dimension_semantics = [#tpu.dimension_semantics<parallel>], iteration_bounds = array<i64: 1>, scalar_prefetch = 0 : i64, scratch_operands = 0 : i64, tpu.core_type = #tpu.core_type<tc>, window_params = [{transform_indices = @transform_0, window_bounds = array<i64: 8, 32>}, {transform_indices = @transform_1, window_bounds = array<i64: 8, 32>}, {pipeline_mode = #tpu.pipeline_mode<synchronous>, transform_indices = @transform_2, window_bounds = array<i64: 32, 64>}, {pipeline_mode = #tpu.pipeline_mode<synchronous>, transform_indices = @transform_3, window_bounds = array<i64: 32, 64>}, {pipeline_mode = #tpu.pipeline_mode<synchronous>, transform_indices = @transform_4, window_bounds = array<i64: 1, 64>}, {pipeline_mode = #tpu.pipeline_mode<synchronous>, transform_indices = @transform_5, window_bounds = array<i64: 1, 64>}, {transform_indices = @transform_6, window_bounds = array<i64: 1>}, {transform_indices = @transform_7, window_bounds = array<i64: 8, 1>}]} {
    %c0 = arith.constant 0 : index
    %c0_0 = arith.constant 0 : index
    %0 = vector.load %arg1[%c0, %c0_0] : memref<8x32xf32, #tpu.memory_space<vmem>>, vector<8x32xf32>
    %1 = arith.truncf %0 : vector<8x32xf32> to vector<8x32xbf16>
    %c0_1 = arith.constant 0 : index
    %c0_2 = arith.constant 0 : index
    %2 = vector.load %arg2[%c0_1, %c0_2] : memref<8x32xf32, #tpu.memory_space<vmem>>, vector<8x32xf32>
    %3 = arith.truncf %2 : vector<8x32xf32> to vector<8x32xbf16>
    %c0_3 = arith.constant 0 : index
    %c0_4 = arith.constant 0 : index
    %4 = vector.load %arg3[%c0_3, %c0_4] : memref<32x64xbf16, #tpu.memory_space<vmem>>, vector<32x64xbf16>
    %cst = arith.constant dense<0.000000e+00> : vector<8x64xf32>
    %5 = tpu.matmul %1, %4, %cst {dimension_numbers = #tpu.dot_dimension_numbers<[1], [0], [0], [1], [0, 0, 1, 1], [], []>} : vector<8x32xbf16>, vector<32x64xbf16>, vector<8x64xf32> -> vector<8x64xf32>
    %c0_5 = arith.constant 0 : index
    %c0_6 = arith.constant 0 : index
    %6 = vector.load %arg4[%c0_5, %c0_6] : memref<32x64xbf16, #tpu.memory_space<vmem>>, vector<32x64xbf16>
    %cst_7 = arith.constant dense<0.000000e+00> : vector<8x64xf32>
    %7 = tpu.matmul %3, %6, %cst_7 {dimension_numbers = #tpu.dot_dimension_numbers<[1], [0], [0], [1], [0, 0, 1, 1], [], []>} : vector<8x32xbf16>, vector<32x64xbf16>, vector<8x64xf32> -> vector<8x64xf32>
    %8 = arith.addf %5, %7 : vector<8x64xf32>
    %c0_8 = arith.constant 0 : index
    %c0_9 = arith.constant 0 : index
    %9 = vector.load %arg5[%c0_8, %c0_9] : memref<1x64xf32, #tpu.memory_space<vmem>>, vector<1x64xf32>
    %10 = vector.broadcast %9 : vector<1x64xf32> to vector<8x64xf32>
    %11 = arith.addf %8, %10 : vector<8x64xf32>
    %cst_10 = arith.constant 0.000000e+00 : f32
    %12 = vector.broadcast %cst_10 : f32 to vector<8x64xf32>
    %13 = arith.maximumf %11, %12 : vector<8x64xf32>
    %c0_11 = arith.constant 0 : index
    %c0_12 = arith.constant 0 : index
    %14 = vector.load %arg6[%c0_11, %c0_12] : memref<1x64xf32, #tpu.memory_space<vmem>>, vector<1x64xf32>
    %15 = vector.broadcast %14 : vector<1x64xf32> to vector<8x64xf32>
    %16 = arith.mulf %13, %15 : vector<8x64xf32>
    %cst_13 = arith.constant dense<0.000000e+00> : vector<8xf32>
    %17 = vector.multi_reduction <add>, %16, %cst_13 [1] : vector<8x64xf32> to vector<8xf32>
    %18 = vector.shape_cast %17 : vector<8xf32> to vector<8x1xf32>
    %c0_14 = arith.constant 0 : index
    %19 = memref.load %arg7[%c0_14] : memref<1xf32, #tpu.memory_space<smem>>
    %20 = vector.broadcast %19 : f32 to vector<8x1xf32>
    %21 = arith.addf %18, %20 : vector<8x1xf32>
    %22 = arith.negf %21 : vector<8x1xf32>
    %23 = math.exp %22 : vector<8x1xf32>
    %cst_15 = arith.constant 1.000000e+00 : f32
    %24 = vector.broadcast %cst_15 : f32 to vector<8x1xf32>
    %25 = arith.addf %24, %23 : vector<8x1xf32>
    %26 = arith.divf %24, %25 : vector<8x1xf32>
    %c0_16 = arith.constant 0 : index
    %c0_17 = arith.constant 0 : index
    %27 = vector.load %arg8[%c0_16, %c0_17] : memref<8x1xf32, #tpu.memory_space<vmem>>, vector<8x1xf32>
    tpu.vector_store %arg8[%c0_16, %c0_17], %26 {strides = array<i32>} : memref<8x1xf32, #tpu.memory_space<vmem>>, vector<8x1xf32>,
    return
  }
  func.func @transform_0(%arg0: i32) -> (i32, i32) {
    %c0_i32 = arith.constant 0 : i32
    %c0_i32_0 = arith.constant 0 : i32
    return %arg0, %c0_i32 : i32, i32
  }
  func.func @transform_1(%arg0: i32) -> (i32, i32) {
    %c0_i32 = arith.constant 0 : i32
    %c0_i32_0 = arith.constant 0 : i32
    return %arg0, %c0_i32 : i32, i32
  }
  func.func @transform_2(%arg0: i32) -> (i32, i32) {
    %c0_i32 = arith.constant 0 : i32
    %c0_i32_0 = arith.constant 0 : i32
    %c0_i32_1 = arith.constant 0 : i32
    return %c0_i32, %c0_i32_0 : i32, i32
  }
  func.func @transform_3(%arg0: i32) -> (i32, i32) {
    %c0_i32 = arith.constant 0 : i32
    %c0_i32_0 = arith.constant 0 : i32
    %c0_i32_1 = arith.constant 0 : i32
    return %c0_i32, %c0_i32_0 : i32, i32
  }
  func.func @transform_4(%arg0: i32) -> (i32, i32) {
    %c0_i32 = arith.constant 0 : i32
    %c0_i32_0 = arith.constant 0 : i32
    %c0_i32_1 = arith.constant 0 : i32
    return %c0_i32, %c0_i32_0 : i32, i32
  }
  func.func @transform_5(%arg0: i32) -> (i32, i32) {
    %c0_i32 = arith.constant 0 : i32
    %c0_i32_0 = arith.constant 0 : i32
    %c0_i32_1 = arith.constant 0 : i32
    return %c0_i32, %c0_i32_0 : i32, i32
  }
  func.func @transform_6(%arg0: i32) -> i32 {
    %c0_i32 = arith.constant 0 : i32
    %c0_i32_0 = arith.constant 0 : i32
    return %c0_i32 : i32
  }
  func.func @transform_7(%arg0: i32) -> (i32, i32) {
    %c0_i32 = arith.constant 0 : i32
    %c0_i32_0 = arith.constant 0 : i32
    return %arg0, %c0_i32 : i32, i32
  }
}

</mosaic_0001>

<llo_original>
// kernel: affinity_network.1
$region0: #{affinity_network.1}
  #allocation0 [shape = 'u32[]', space=smem, size = 0x4, offset = 0x4, fixed_abs, tag = 'smem constant byte address 0x4 - core index']
  #allocation1 [shape = 'u32[72,128]{1,0:T(1,128)}', space=vmem, size = 0x9000, scoped, tag = 'internal scratch']
  #allocation2 [shape = 'f32[1]{0:T(128)S(6)}', space=smem, size = 0x200, scoped, tag = 'scoped memory for affinity_network.1']
  %s0 = inlined_call_operand.hbm [shape: f32[8,32], index: 0, kind: input, shape index: {}]
  %s1 = inlined_call_operand.hbm [shape: f32[8,32], index: 1, kind: input, shape index: {}]
  %s2 = inlined_call_operand.hbm [shape: bf16[32,64], index: 2, kind: input, shape index: {}]
  %s3 = inlined_call_operand.hbm [shape: bf16[32,64], index: 3, kind: input, shape index: {}]
  %s4 = inlined_call_operand.vmem [shape: f32[1,64], index: 4, kind: input, shape index: {}]
  %s5 = inlined_call_operand.vmem [shape: f32[1,64], index: 5, kind: input, shape index: {}]
  %s6 = inlined_call_operand.<no memory space> [shape: f32[1], index: 6, kind: input, shape index: {}]
  %s7 = inlined_call_operand.vmem [shape: f32[8,1], index: 7, kind: output, shape index: {}]
  %s8 = sld [smem:[#allocation0]]
  $region54: #{affinity_network.1} parent=0
    _
  %s10 = ssub.s32 1, %s8
  %s11 = scalar_select 0, %s10, %s8
  %12 = sst [smem:[#allocation2]] %s6
  $region1: #{affinity_network.1} parent=0
    #allocation3 [shape = 'u8[4096]{0}', space=vmem, size = 0x1000, scoped, tag = 'input window, operand 0, single buffered']
    #allocation4 [shape = 's32[1]{0}', space=sflag, size = 0x4, scoped, tag = 'scoped memory for affinity_network.1']
    #allocation5 [shape = 'u8[4096]{0}', space=vmem, size = 0x1000, scoped, tag = 'input window, operand 1, single buffered']
    #allocation6 [shape = 's32[1]{0}', space=sflag, size = 0x4, scoped, tag = 'scoped memory for affinity_network.1']
    #allocation7 [shape = 'u8[8192]{0}', space=vmem, size = 0x2000, scoped, tag = 'input window, operand 2, single buffered']
    #allocation8 [shape = 'u8[8192]{0}', space=vmem, size = 0x2000, scoped, tag = 'input window, operand 3, single buffered']
    #allocation9 [shape = 's32[1]{0}', space=sflag, size = 0x4, scoped, tag = 'scoped memory for affinity_network.1']
    %13 = vsyncpa [#allocation4], 0
    %14 = vsyncpa [#allocation6], 0
    %15 = vsyncpa [#allocation9], 0
    // Predicated region
    $region2: #{affinity_network.1} parent=1 // pred_check
      _
    $region3: #{affinity_network.1} parent=1 // pred_check_branch
      %17 = sbr.rel (0) target = $region5
    $region4: #{affinity_network.1} parent=1 // pred_region
      %19 = vsyncadd [#allocation4], 0
      %s21 = sshll.u32 %s0, 4
      %s22 = int_to_ptr.hbm [resolvable:$true] %s21
      %s23 = sshll.u32 [#allocation3], 4
      %s24 = int_to_ptr.vmem [resolvable:$true] %s23
      %26 = dma.hbm_to_vmem [thread:$0]  %s22, 128, %s24, [#allocation4]
    $region5: #{affinity_network.1} parent=1 // pred_fallthru
      _
    // Predicated region
    $region6: #{affinity_network.1} parent=1 // pred_check
      _
    $region7: #{affinity_network.1} parent=1 // pred_check_branch
      %28 = sbr.rel (0) target = $region9
    $region8: #{affinity_network.1} parent=1 // pred_region
      %30 = vsyncadd [#allocation6], 0
      %s32 = sshll.u32 %s1, 4
      %s33 = int_to_ptr.hbm [resolvable:$true] %s32
      %s34 = sshll.u32 [#allocation5], 4
      %s35 = int_to_ptr.vmem [resolvable:$true] %s34
      %37 = dma.hbm_to_vmem [thread:$0]  %s33, 128, %s35, [#allocation6]
    $region9: #{affinity_network.1} parent=1 // pred_fallthru
      _
    // Predicated region
    $region10: #{affinity_network.1} parent=1 // pred_check
      _
    $region11: #{affinity_network.1} parent=1 // pred_check_branch
      %39 = sbr.rel (0) target = $region13
    $region12: #{affinity_network.1} parent=1 // pred_region
      %41 = vsyncadd [#allocation6], 0
      %s42 = sshll.u32 %s2, 4
      %s43 = int_to_ptr.hbm [resolvable:$true] %s42
      %s44 = sshll.u32 [#allocation7], 4
      %s45 = int_to_ptr.vmem [resolvable:$true] %s44
      %50 = dma.hbm_to_vmem [thread:$0]  %s43, 256, %s45, [#allocation6], 64, 64, 4
    $region13: #{affinity_network.1} parent=1 // pred_fallthru
      _
    // Predicated region
    $region14: #{affinity_network.1} parent=1 // pred_check
      _
    $region15: #{affinity_network.1} parent=1 // pred_check_branch
      %52 = sbr.rel (0) target = $region17
    $region16: #{affinity_network.1} parent=1 // pred_region
      %54 = vsyncadd [#allocation9], 0
      %s55 = sshll.u32 %s3, 4
      %s56 = int_to_ptr.hbm [resolvable:$true] %s55
      %s57 = sshll.u32 [#allocation8], 4
      %s58 = int_to_ptr.vmem [resolvable:$true] %s57
      %63 = dma.hbm_to_vmem [thread:$0]  %s56, 256, %s58, [#allocation9], 64, 64, 4
    $region17: #{affinity_network.1} parent=1 // pred_fallthru
      _
    // Predicated region
    $region18: #{affinity_network.1} parent=1 // pred_check
      _
    $region19: #{affinity_network.1} parent=1 // pred_check_branch
      %65 = sbr.rel (0) target = $region21
    $region20: #{affinity_network.1} parent=1 // pred_region
      _
    $region21: #{affinity_network.1} parent=1 // pred_fallthru
      _
    // Predicated region
    $region22: #{affinity_network.1} parent=1 // pred_check
      _
    $region23: #{affinity_network.1} parent=1 // pred_check_branch
      %67 = sbr.rel (0) target = $region25
    $region24: #{affinity_network.1} parent=1 // pred_region
      _
    $region25: #{affinity_network.1} parent=1 // pred_fallthru
      _
    // Predicated region
    $region26: #{affinity_network.1} parent=1 // pred_check
      _
    $region27: #{affinity_network.1} parent=1 // pred_check_branch
      %69 = sbr.rel (0) target = $region29
    $region28: #{affinity_network.1} parent=1 // pred_region
      _
    $region29: #{affinity_network.1} parent=1 // pred_fallthru
      _
    // Predicated region
    $region30: #{affinity_network.1} parent=1 // pred_check
      _
    $region31: #{affinity_network.1} parent=1 // pred_check_branch
      %71 = sbr.rel (0) target = $region33
    $region32: #{affinity_network.1} parent=1 // pred_region
      %73 = dma.done [#allocation4], 128
    $region33: #{affinity_network.1} parent=1 // pred_fallthru
      _
    // Predicated region
    $region34: #{affinity_network.1} parent=1 // pred_check
      _
    $region35: #{affinity_network.1} parent=1 // pred_check_branch
      %75 = sbr.rel (0) target = $region37
    $region36: #{affinity_network.1} parent=1 // pred_region
      %77 = dma.done [#allocation6], 128
    $region37: #{affinity_network.1} parent=1 // pred_fallthru
      _
    // Predicated region
    $region38: #{affinity_network.1} parent=1 // pred_check
      _
    $region39: #{affinity_network.1} parent=1 // pred_check_branch
      %79 = sbr.rel (0) target = $region41
    $region40: #{affinity_network.1} parent=1 // pred_region
      %81 = dma.done [#allocation6], 256
    $region41: #{affinity_network.1} parent=1 // pred_fallthru
      _
    // Predicated region
    $region42: #{affinity_network.1} parent=1 // pred_check
      _
    $region43: #{affinity_network.1} parent=1 // pred_check_branch
      %83 = sbr.rel (0) target = $region45
    $region44: #{affinity_network.1} parent=1 // pred_region
      %85 = dma.done [#allocation9], 256
    $region45: #{affinity_network.1} parent=1 // pred_fallthru
      _
    %v87 = vld [vmem:[#allocation3] sm:$0xff]
    %v88 = vpack.c.bf16 %v87, %v87
    %v89 = vld [vmem:[#allocation5] sm:$0xff]
    %v90 = vpack.c.bf16 %v89, %v89
    %v91 = vld [vmem:[#allocation7] sm:$0xf]
    %v92 = vld [vmem:[#allocation7 + $0x4] sm:$0xf]
    %v93 = vld [vmem:[#allocation7 + $0x8] sm:$0xf]
    %v94 = vld [vmem:[#allocation7 + $0xc] sm:$0xf]
    %v95 = vld [vmem:[#allocation8] sm:$0xf]
    %v96 = vld [vmem:[#allocation8 + $0x4] sm:$0xf]
    %v97 = vld [vmem:[#allocation8 + $0x8] sm:$0xf]
    %v98 = vld [vmem:[#allocation8 + $0xc] sm:$0xf]
    %v103 = vunpack.c.l.b16 %v95
    %v104 = vunpack.c.l.b16 %v96
    %v105 = vunpack.c.l.b16 %v97
    %v106 = vunpack.c.l.b16 %v98
    %v107 = vpack.c.b16 %v104, %v103
    %v108 = vpack.c.b16 %v106, %v105
    %vm111 = vcmask 261120
    %v113 = vsel %vm111, %v90, 0
    %115 = vmatpush.bf16.msra.mxu0 0
    %116 = vmatpush.bf16.msra.mxu0 0
    %117 = vmatpush.bf16.msra.mxu0 0
    %118 = vmatpush.bf16.msra.mxu0 0
    %119 = vmatpush.bf16.msra.mxu0 0
    %120 = vmatpush.bf16.msra.mxu0 0
    %121 = vmatpush.bf16.msra.mxu0 %v108
    %122 = vmatpush.bf16.msra.mxu0 %v107
    %123 = vmatmul.bf16.gmra.mxu0 %v113
    %v124 = vpop.f32.mrf.mxu0
    %v125 = vadd.f32 0.0, %v124
    %v126 = vpop.f32.mrf.mxu0
    %127 = vdwg.mxu0
    %v132 = vunpack.c.l.b16 %v91
    %v133 = vunpack.c.l.b16 %v92
    %v134 = vunpack.c.l.b16 %v93
    %v135 = vunpack.c.l.b16 %v94
    %v136 = vpack.c.b16 %v133, %v132
    %v137 = vpack.c.b16 %v135, %v134
    %v141 = vsel %vm111, %v88, 0
    %143 = vmatpush.bf16.msra.mxu0 0
    %144 = vmatpush.bf16.msra.mxu0 0
    %145 = vmatpush.bf16.msra.mxu0 0
    %146 = vmatpush.bf16.msra.mxu0 0
    %147 = vmatpush.bf16.msra.mxu0 0
    %148 = vmatpush.bf16.msra.mxu0 0
    %149 = vmatpush.bf16.msra.mxu0 %v137
    %150 = vmatpush.bf16.msra.mxu0 %v136
    %151 = vmatmul.bf16.gmra.mxu0 %v141
    %v152 = vpop.f32.mrf.mxu0
    %v153 = vadd.f32 %v125, %v152
    %v154 = vpop.f32.mrf.mxu0
    %155 = vdwg.mxu0
    %v156 = vld [vmem:[%s4] sm:$0x1]
    %v158 = vperm.slane %v156, 0
    %v160 = vadd.f32 %v153, %v158
    %v161 = vmax.f32 %v160, 0.0
    %v162 = vld [vmem:[%s5] sm:$0x1]
    %v164 = vperm.slane %v162, 0
    %v166 = vmul.f32 %v161, %v164
    %vm167 = vcmask 523264
    %v168 = vsel %vm167, %v166, 0.0
    %169 = vadd.xlane.f32.xlu0 %v168
    %v170 = vpop.xlane.xlu0 %169
    %s171 = sld [smem:[#allocation2]]
    %v172 = vstv %s171
    %v173 = vadd.f32 %v170, %v172
    %v174 = vxor.u32 %v173, 2147483648
    %v175 = vmul.f32 %v174, 1.442695
    %v176 = vpow.pop %v175
    %v177 = vadd.f32 %v176, 1.0
    %v178 = vrcp.pop %v177
    %v179 = vmul.f32 %v177, %v178
    %v180 = vsub.f32 1.0, %v179
    %v181 = vmul.f32 %v178, %v180
    %v182 = vadd.f32 %v178, %v181
    %vm183 = vweird.f32 %v177
    %vm184 = vweird.f32 %v178
    %vm185 = vmor %vm183, %vm184
    %v186 = vsel %vm185, %v178, %v182
    %v187 = vand.u32 2147483647, %v177
    %vm188 = vcmp.eq.f32.partialorder %v187, 8.507059e+37
    %v189 = vand.u32 %v177, 2147483648
    %v190 = vor.u32 1.1754944e-38, %v189
    %v191 = vsel %vm188, %v190, %v186
    %v192 = vmul.f32 1.0, %v191
    %vm193 = vcmask 7168
    %194 = vst.msk [vmem:[%s7] sm:$0xff] %vm193, %v192
    // Predicated region
    $region46: #{affinity_network.1} parent=1 // pred_check
      _
    $region47: #{affinity_network.1} parent=1 // pred_check_branch
      %196 = sbr.rel (0) target = $region49
    $region48: #{affinity_network.1} parent=1 // pred_region
      _
    $region49: #{affinity_network.1} parent=1 // pred_fallthru
      _
    // Predicated region
    $region50: #{affinity_network.1} parent=1 // pred_check
      _
    $region51: #{affinity_network.1} parent=1 // pred_check_branch
      %198 = sbr.rel (0) target = $region53
    $region52: #{affinity_network.1} parent=1 // pred_region
      _
    $region53: #{affinity_network.1} parent=1 // pred_fallthru
      _
    %199 = vsyncpa [#allocation4], 1
    %200 = vsyncpa [#allocation6], 1
    %201 = vsyncpa [#allocation9], 1

</llo_original>
